<compile_context>
chip_gen: v7x
topology: tpu7x:2x2x1
jax: 0.10.0
libtpu: 0.0.40
codegen_flags: <defaults>
</compile_context>

<pallas_src>
import functools

import jax
import jax.numpy as jnp
from jax import lax
from jax.experimental import pallas as pl
from jax.experimental.pallas import tpu as pltpu

LANE = 128                 # TPU lane width (last dim)
DEFAULT_BLOCK_ROWS = 1024  # 1024 x 128 x 4 B = 512 KiB per f32 input block


def _sublane_multiple(dtype) -> int:
    """Minimum sublane multiple for the dtype's native (sublane, 128) tiling."""
    bits = jnp.dtype(dtype).itemsize * 8
    return max(8, 256 // bits)   # 8 for 32-bit, 16 for 16-bit, 32 for 8-bit


def _mape_partial_kernel(pred_ref, tgt_ref, out_ref, acc_ref, *,
                         epsilon, rows, block_rows, steps_per_split,
                         needs_mask, approx_reciprocal):
    """Accumulate sum(|(t - p) / (t + eps)|) into a per-core (8, 128) partial."""
    c = pl.program_id(0)          # TensorCore split (parallel axis)
    i = pl.program_id(1)          # streaming reduction axis (arbitrary)

    @pl.when(i == 0)
    def _init():
        acc_ref[...] = jnp.zeros_like(acc_ref)

    t = tgt_ref[...].astype(jnp.float32)
    p = pred_ref[...].astype(jnp.float32)
    denom = t + jnp.float32(epsilon)
    if approx_reciprocal:
        ape = jnp.abs((t - p) * pl.reciprocal(denom, approx=True))
    else:
        ape = jnp.abs((t - p) / denom)

    if needs_mask:
        # Intended (unclamped) global block id; blocks past the end of the
        # array re-read a valid block (index_map is clamped) and are fully
        # masked here, as are the out-of-range rows of the last partial block.
        g = c * steps_per_split + i
        valid_rows = rows - g * block_rows
        row_id = lax.broadcasted_iota(jnp.int32, (block_rows, LANE), 0)
        ape = jnp.where(row_id < valid_rows, ape, jnp.float32(0.0))

    # Sublane-only reduce per step; keep 128 lane partials resident in VMEM.
    acc_ref[...] = acc_ref[...] + jnp.sum(ape, axis=0, keepdims=True)

    @pl.when(i == pl.num_programs(1) - 1)
    def _finalize():
        # Store the (1, 128) lane partials into row 0 of this core's (8, 128)
        # lane-dense output block; remaining rows are zero (wrapper sums all).
        row0 = lax.broadcasted_iota(jnp.int32, (8, LANE), 0) == 0
        out_ref[...] = jnp.where(row0, acc_ref[...], jnp.float32(0.0))


def mape_loss(predictions, targets, epsilon=1e-8, *,
              block_rows=DEFAULT_BLOCK_ROWS, approx_reciprocal=False):
    """Pallas implementation of MAPELoss.forward."""
    assert predictions.shape == targets.shape
    n = predictions.size
    assert n > 0

    # Keep block_rows a multiple of 32 so it is sublane-aligned for any dtype.
    block_rows = max(32, (block_rows // 32) * 32)

    p = predictions.reshape(-1)
    t = targets.reshape(-1)

    # Only pad the (rare, < 128 element) sub-lane tail so the flat array can be
    # viewed as (rows, 128). Padding pred == tgt == 1 contributes exactly 0.
    lane_pad = (-n) % LANE
    if lane_pad:
        p = jnp.concatenate([p, jnp.ones((lane_pad,), p.dtype)])
        t = jnp.concatenate([t, jnp.ones((lane_pad,), t.dtype)])

    rows = (n + lane_pad) // LANE
    p2 = p.reshape(rows, LANE)
    t2 = t.reshape(rows, LANE)

    # Largest block that fits the array; multiple of the dtype sublane tiling,
    # or equal to the full row count for tiny inputs.
    sub = max(_sublane_multiple(p2.dtype), _sublane_multiple(t2.dtype))
    if rows >= block_rows:
        br = block_rows
    elif rows >= sub:
        br = (rows // sub) * sub
    else:
        br = rows

    nblocks = pl.cdiv(rows, br)
    nsplits = 2 if nblocks >= 2 else 1      # megacore split on v7x; serial elsewhere
    steps_per_split = pl.cdiv(nblocks, nsplits)

    # Mask is only needed when the last block is partial or when the split
    # over-covers the block range; otherwise it compiles away entirely.
    needs_mask = (rows % br != 0) or (nsplits * steps_per_split != nblocks)

    kernel = functools.partial(
        _mape_partial_kernel,
        epsilon=epsilon,
        rows=rows,
        block_rows=br,
        steps_per_split=steps_per_split,
        needs_mask=needs_mask,
        approx_reciprocal=approx_reciprocal,
    )

    def in_map(c, i):
        # Clamp so out-of-range steps re-read a valid block (their contribution
        # is zeroed by the in-kernel row mask).
        return (jnp.minimum(c * steps_per_split + i, nblocks - 1), 0)

    partials = pl.pallas_call(
        kernel,
        out_shape=jax.ShapeDtypeStruct((nsplits * 8, LANE), jnp.float32),
        grid_spec=pltpu.PrefetchScalarGridSpec(
            num_scalar_prefetch=0,
            grid=(nsplits, steps_per_split),
            in_specs=[
                pl.BlockSpec((br, LANE), in_map),
                pl.BlockSpec((br, LANE), in_map),
            ],
            out_specs=pl.BlockSpec((8, LANE), lambda c, i: (c, 0)),
            scratch_shapes=[pltpu.VMEM((1, LANE), jnp.float32)],
        ),
        compiler_params=pltpu.CompilerParams(
            dimension_semantics=("parallel", "arbitrary"),
        ),
    )(p2, t2)

    total = jnp.sum(partials)   # tiny (nsplits*8, 128) reduce in plain JAX
    return total / jnp.float32(n) * jnp.float32(100.0)


if __name__ == "__main__":
    key = jax.random.PRNGKey(0)
    kp, kt = jax.random.split(key)

    # Small shapes consistent with the module (elementwise on any shape).
    shape = (2, 4, 16, 16)
    predictions = jax.random.normal(kp, shape, dtype=jnp.float32)
    # Keep targets bounded away from zero so the reference is well conditioned.
    targets = jax.random.uniform(kt, shape, dtype=jnp.float32,
                                 minval=0.5, maxval=2.0)

    out = jax.block_until_ready(mape_loss(predictions, targets))

    # Pure-JAX reference check.
    ref = jnp.mean(jnp.abs((targets - predictions) / (targets + 1e-8))) * 100.0
    assert jnp.allclose(out, ref, rtol=1e-5, atol=1e-4), (out, ref)

    print("KERNEL_OK")
</pallas_src>

<mosaic_0001>
module attributes {stable_mosaic.version = 11 : i64} {
  func.func @_mape_partial_kernel(%arg0: i32, %arg1: i32, %arg2: memref<16x128xf32, #tpu.memory_space<vmem>>, %arg3: memref<16x128xf32, #tpu.memory_space<vmem>>, %arg4: memref<8x128xf32, #tpu.memory_space<vmem>>, %arg5: memref<1x128xf32, #tpu.memory_space<vmem>>) attributes {dimension_semantics = [#tpu.dimension_semantics<parallel>, #tpu.dimension_semantics<arbitrary>], iteration_bounds = array<i64: 1, 1>, scalar_prefetch = 0 : i64, scratch_operands = 1 : i64, tpu.core_type = #tpu.core_type<tc>, window_params = [{transform_indices = @transform_0, window_bounds = array<i64: 16, 128>}, {transform_indices = @transform_1, window_bounds = array<i64: 16, 128>}, {transform_indices = @transform_2, window_bounds = array<i64: 8, 128>}]} {
    %c0_i32 = arith.constant 0 : i32
    %0 = arith.cmpi eq, %arg1, %c0_i32 : i32
    %1 = arith.extui %0 : i1 to i32
    %c0_i32_0 = arith.constant 0 : i32
    %2 = arith.cmpi ne, %1, %c0_i32_0 : i32
    scf.if %2 {
      %cst_11 = arith.constant 0.000000e+00 : f32
      %18 = vector.broadcast %cst_11 : f32 to vector<1x128xf32>
      %c0_12 = arith.constant 0 : index
      %c0_13 = arith.constant 0 : index
      %19 = vector.load %arg5[%c0_12, %c0_13] : memref<1x128xf32, #tpu.memory_space<vmem>>, vector<1x128xf32>
      tpu.vector_store %arg5[%c0_12, %c0_13], %18 {strides = array<i32>} : memref<1x128xf32, #tpu.memory_space<vmem>>, vector<1x128xf32>,
    } else {
    }
    %c0 = arith.constant 0 : index
    %c0_1 = arith.constant 0 : index
    %3 = vector.load %arg3[%c0, %c0_1] : memref<16x128xf32, #tpu.memory_space<vmem>>, vector<16x128xf32>
    %c0_2 = arith.constant 0 : index
    %c0_3 = arith.constant 0 : index
    %4 = vector.load %arg2[%c0_2, %c0_3] : memref<16x128xf32, #tpu.memory_space<vmem>>, vector<16x128xf32>
    %cst = arith.constant 9.99999993E-9 : f32
    %5 = vector.broadcast %cst : f32 to vector<16x128xf32>
    %6 = arith.addf %3, %5 : vector<16x128xf32>
    %7 = arith.subf %3, %4 : vector<16x128xf32>
    %8 = arith.divf %7, %6 : vector<16x128xf32>
    %9 = math.absf %8 : vector<16x128xf32>
    %c0_4 = arith.constant 0 : index
    %c0_5 = arith.constant 0 : index
    %10 = vector.load %arg5[%c0_4, %c0_5] : memref<1x128xf32, #tpu.memory_space<vmem>>, vector<1x128xf32>
    %cst_6 = arith.constant dense<0.000000e+00> : vector<128xf32>
    %11 = vector.multi_reduction <add>, %9, %cst_6 [0] : vector<16x128xf32> to vector<128xf32>
    %12 = vector.shape_cast %11 : vector<128xf32> to vector<1x128xf32>
    %13 = arith.addf %10, %12 : vector<1x128xf32>
    %c0_7 = arith.constant 0 : index
    %c0_8 = arith.constant 0 : index
    %14 = vector.load %arg5[%c0_7, %c0_8] : memref<1x128xf32, #tpu.memory_space<vmem>>, vector<1x128xf32>
    tpu.vector_store %arg5[%c0_7, %c0_8], %13 {strides = array<i32>} : memref<1x128xf32, #tpu.memory_space<vmem>>, vector<1x128xf32>,
    %c0_i32_9 = arith.constant 0 : i32
    %15 = arith.cmpi eq, %arg1, %c0_i32_9 : i32
    %16 = arith.extui %15 : i1 to i32
    %c0_i32_10 = arith.constant 0 : i32
    %17 = arith.cmpi ne, %16, %c0_i32_10 : i32
    scf.if %17 {
      %18 = tpu.iota {dimensions = array<i32: 0>} : vector<8x128xi32>
      %c0_i32_11 = arith.constant 0 : i32
      %19 = vector.broadcast %c0_i32_11 : i32 to vector<8x128xi32>
      %20 = arith.cmpi eq, %18, %19 : vector<8x128xi32>
      %c0_12 = arith.constant 0 : index
      %c0_13 = arith.constant 0 : index
      %21 = vector.load %arg5[%c0_12, %c0_13] : memref<1x128xf32, #tpu.memory_space<vmem>>, vector<1x128xf32>
      %cst_14 = arith.constant 0.000000e+00 : f32
      %22 = vector.shape_cast %21 : vector<1x128xf32> to vector<1x128xf32>
      %23 = vector.broadcast %22 : vector<1x128xf32> to vector<8x128xf32>
      %24 = vector.broadcast %cst_14 : f32 to vector<8x128xf32>
      %25 = arith.select %20, %23, %24 : vector<8x128xi1>, vector<8x128xf32>
      %c0_15 = arith.constant 0 : index
      %c0_16 = arith.constant 0 : index
      %26 = vector.load %arg4[%c0_15, %c0_16] : memref<8x128xf32, #tpu.memory_space<vmem>>, vector<8x128xf32>
      tpu.vector_store %arg4[%c0_15, %c0_16], %25 {strides = array<i32>} : memref<8x128xf32, #tpu.memory_space<vmem>>, vector<8x128xf32>,
    } else {
    }
    return
  }
  func.func @transform_0(%arg0: i32, %arg1: i32) -> (i32, i32) {
    %c1_i32 = arith.constant 1 : i32
    %0 = arith.muli %arg0, %c1_i32 : i32
    %1 = arith.addi %0, %arg1 : i32
    %c0_i32 = arith.constant 0 : i32
    %2 = arith.minsi %1, %c0_i32 : i32
    %c0_i32_0 = arith.constant 0 : i32
    %c0_i32_1 = arith.constant 0 : i32
    return %2, %c0_i32_0 : i32, i32
  }
  func.func @transform_1(%arg0: i32, %arg1: i32) -> (i32, i32) {
    %c1_i32 = arith.constant 1 : i32
    %0 = arith.muli %arg0, %c1_i32 : i32
    %1 = arith.addi %0, %arg1 : i32
    %c0_i32 = arith.constant 0 : i32
    %2 = arith.minsi %1, %c0_i32 : i32
    %c0_i32_0 = arith.constant 0 : i32
    %c0_i32_1 = arith.constant 0 : i32
    return %2, %c0_i32_0 : i32, i32
  }
  func.func @transform_2(%arg0: i32, %arg1: i32) -> (i32, i32) {
    %c0_i32 = arith.constant 0 : i32
    %c0_i32_0 = arith.constant 0 : i32
    return %arg0, %c0_i32 : i32, i32
  }
}

</mosaic_0001>

<llo_original>
// kernel: tpu_custom_call.1
$region0: #{tpu_custom_call.1}
  #allocation0 [shape = 'u32[]', space=smem, size = 0x4, offset = 0x4, fixed_abs, tag = 'smem constant byte address 0x4 - core index']
  #allocation1 [shape = 'u32[144,128]{1,0:T(1,128)}', space=vmem, size = 0x12000, scoped, tag = 'internal scratch']
  #allocation2 [shape = 'f32[1,128]{1,0:T(1,128)}', space=vmem, size = 0x200, scoped, tag = 'scratch operand']
  %s0 = inlined_call_operand.hbm [shape: f32[16,128], index: 0, kind: input, shape index: {}]
  %s1 = inlined_call_operand.hbm [shape: f32[16,128], index: 1, kind: input, shape index: {}]
  %s2 = inlined_call_operand.hbm [shape: f32[8,128], index: 2, kind: output, shape index: {}]
  %s3 = sld [smem:[#allocation0]]
  $region34: #{tpu_custom_call.1} parent=0
    _
  %s5 = ssub.s32 1, %s3
  %s6 = scalar_select 0, %s5, %s3
  $region1: #{tpu_custom_call.1} parent=0
    #allocation3 [shape = 'u8[8192]{0}', space=vmem, size = 0x2000, scoped, tag = 'input window, operand 0, single buffered']
    #allocation4 [shape = 's32[1]{0}', space=sflag, size = 0x4, scoped, tag = 'scoped memory for tpu_custom_call.1']
    #allocation5 [shape = 's32[1]{0}', space=sflag, size = 0x4, scoped, tag = 'scoped memory for tpu_custom_call.1']
    #allocation6 [shape = 'u8[8192]{0}', space=vmem, size = 0x2000, scoped, tag = 'input window, operand 1, single buffered']
    #allocation7 [shape = 's32[1]{0}', space=sflag, size = 0x4, scoped, tag = 'scoped memory for tpu_custom_call.1']
    #allocation8 [shape = 'u8[4096]{0}', space=vmem, size = 0x1000, scoped, tag = 'output window, operand 0, single buffered']
    %7 = vsyncpa [#allocation4], 0
    %8 = vsyncpa [#allocation7], 0
    %9 = vsyncpa [#allocation5], 0
    // Predicated region
    $region2: #{tpu_custom_call.1} parent=1 // pred_check
      _
    $region3: #{tpu_custom_call.1} parent=1 // pred_check_branch
      %11 = sbr.rel (0) target = $region5
    $region4: #{tpu_custom_call.1} parent=1 // pred_region
      %s12 = sadd.s32 0, 0
      %p13 = scmp.lt.s32.totalorder %s12, 0
      %s14 = scalar_select %p13, %s12, 0
      %s15 = smul.u32 2, %s14
      %s17 = ssub.s32 256, 256
      %18 = vsyncadd [#allocation4], %s17
      %s19 = smul.addr %s15, 128
      %s20 = scalar_lea.hbm %s0, %s19
      %s21 = sshll.u32 [#allocation3], 4
      %s22 = int_to_ptr.vmem [resolvable:$true] %s21
      %27 = dma.hbm_to_vmem [thread:$0]  %s20, 256, %s22, [#allocation4], 128, 128, 8
    $region5: #{tpu_custom_call.1} parent=1 // pred_fallthru
      _
    // Predicated region
    $region6: #{tpu_custom_call.1} parent=1 // pred_check
      _
    $region7: #{tpu_custom_call.1} parent=1 // pred_check_branch
      %29 = sbr.rel (0) target = $region9
    $region8: #{tpu_custom_call.1} parent=1 // pred_region
      %s30 = sadd.s32 0, 0
      %p31 = scmp.lt.s32.totalorder %s30, 0
      %s32 = scalar_select %p31, %s30, 0
      %s33 = smul.u32 2, %s32
      %s35 = ssub.s32 256, 256
      %36 = vsyncadd [#allocation7], %s35
      %s37 = smul.addr %s33, 128
      %s38 = scalar_lea.hbm %s1, %s37
      %s39 = sshll.u32 [#allocation6], 4
      %s40 = int_to_ptr.vmem [resolvable:$true] %s39
      %45 = dma.hbm_to_vmem [thread:$0]  %s38, 256, %s40, [#allocation7], 128, 128, 8
    $region9: #{tpu_custom_call.1} parent=1 // pred_fallthru
      _
    // Predicated region
    $region10: #{tpu_custom_call.1} parent=1 // pred_check
      _
    $region11: #{tpu_custom_call.1} parent=1 // pred_check_branch
      %47 = sbr.rel (0) target = $region13
    $region12: #{tpu_custom_call.1} parent=1 // pred_region
      %48 = dma.done [#allocation4], 256
    $region13: #{tpu_custom_call.1} parent=1 // pred_fallthru
      _
    // Predicated region
    $region14: #{tpu_custom_call.1} parent=1 // pred_check
      _
    $region15: #{tpu_custom_call.1} parent=1 // pred_check_branch
      %50 = sbr.rel (0) target = $region17
    $region16: #{tpu_custom_call.1} parent=1 // pred_region
      %51 = dma.done [#allocation7], 256
    $region17: #{tpu_custom_call.1} parent=1 // pred_fallthru
      _
    %s52 = sadd.s32 0, 0
    %p53 = scmp.lt.s32.totalorder %s52, 0
    %s54 = scalar_select %p53, %s52, 0
    %s55 = smul.u32 2, %s54
    %s56 = sadd.s32 0, 0
    %p57 = scmp.lt.s32.totalorder %s56, 0
    %s58 = scalar_select %p57, %s56, 0
    %s59 = smul.u32 2, %s58
    %p60 = scmp.eq.s32.totalorder 0, 0
    // Predicated region
    $region18: #{tpu_custom_call.1} parent=1 // pred_check
      %p61 = pneg %p60
    $region19: #{tpu_custom_call.1} parent=1 // pred_check_branch
      %63 = sbr.rel (%p61) target = $region21
    $region20: #{tpu_custom_call.1} parent=1 // pred_region
      %64 = vst [vmem:[#allocation2] sm:$0x1] 0.0
    $region21: #{tpu_custom_call.1} parent=1 // pred_fallthru
      _
    %v65 = vld [vmem:[#allocation6] sm:$0xff]
    %v66 = vld [vmem:[#allocation6 + $0x8] sm:$0xff]
    %v67 = vld [vmem:[#allocation3] sm:$0xff]
    %v68 = vld [vmem:[#allocation3 + $0x8] sm:$0xff]
    %v69 = vadd.f32 %v65, 1e-08
    %v70 = vadd.f32 %v66, 1e-08
    %v71 = vsub.f32 %v65, %v67
    %v72 = vsub.f32 %v66, %v68
    %v73 = vrcp.pop %v69
    %v74 = vmul.f32 %v71, %v73
    %v75 = vrcp.pop %v70
    %v76 = vmul.f32 %v72, %v75
    %v77 = vand.u32 2147483647, %v74
    %v78 = vand.u32 2147483647, %v76
    %v79 = vld [vmem:[#allocation2] sm:$0x1]
    %v80 = vadd.f32 %v77, %v78
    %v81 = vrot.slane %v80, 4
    %v82 = vadd.f32 %v80, %v81
    %v83 = vrot.slane %v82, 2
    %v84 = vadd.f32 %v82, %v83
    %v85 = vrot.slane %v84, 1
    %v86 = vadd.f32 %v84, %v85
    %v87 = vadd.f32 %v79, %v86
    %88 = vst [vmem:[#allocation2] sm:$0x1] %v87
    // Predicated region
    $region22: #{tpu_custom_call.1} parent=1 // pred_check
      %p89 = pneg %p60
    $region23: #{tpu_custom_call.1} parent=1 // pred_check_branch
      %91 = sbr.rel (%p89) target = $region25
    $region24: #{tpu_custom_call.1} parent=1 // pred_region
      %v92 = vlaneseq
      %v93 = vshrl.u32 %v92, 7
      %vm94 = vcmp.eq.s32.totalorder %v93, 0
      %v95 = vld [vmem:[#allocation2] sm:$0x1]
      %v97 = vlaneseq
      %v98 = vshrl.u32 %v97, 7
      %v99 = vsub.s32 0, %v98
      %v100 = vrot.slane %v95, %v99
      %v102 = vsel %vm94, %v100, 0.0
      %103 = vst [vmem:[#allocation8] sm:$0xff] %v102
    $region25: #{tpu_custom_call.1} parent=1 // pred_fallthru
      _
    // Predicated region
    $region26: #{tpu_custom_call.1} parent=1 // pred_check
      _
    $region27: #{tpu_custom_call.1} parent=1 // pred_check_branch
      %105 = sbr.rel (0) target = $region29
    $region28: #{tpu_custom_call.1} parent=1 // pred_region
      %s107 = ssub.s32 128, 128
      %108 = vsyncadd [#allocation5], %s107
      %s110 = sshll.u32 [#allocation8], 4
      %s111 = int_to_ptr.vmem [resolvable:$true] %s110
      %113 = dma.vmem_to_hbm [thread:$0]  %s111, 128, %s2, [#allocation5]
    $region29: #{tpu_custom_call.1} parent=1 // pred_fallthru
      _
    // Predicated region
    $region30: #{tpu_custom_call.1} parent=1 // pred_check
      _
    $region31: #{tpu_custom_call.1} parent=1 // pred_check_branch
      %115 = sbr.rel (0) target = $region33
    $region32: #{tpu_custom_call.1} parent=1 // pred_region
      %116 = dma.done [#allocation5], 128
    $region33: #{tpu_custom_call.1} parent=1 // pred_fallthru
      _
    %117 = vsyncpa [#allocation4], 1
    %118 = vsyncpa [#allocation7], 1
    %119 = vsyncpa [#allocation5], 1

</llo_original>
